<compile_context>
chip_gen: v7x
topology: tpu7x:2x2x1
jax: 0.10.0
libtpu: 0.0.40
codegen_flags: <defaults>
</compile_context>

<pallas_src>
import jax
import jax.numpy as jnp
from jax.experimental import pallas as pl
from jax.experimental.pallas import tpu as pltpu

# ----------------------------- model config ---------------------------------
BATCH = 2           # batch_size
NUM_TILES = 8       # num_tiles (bag size)
CHANNELS = 4        # image channels
HEIGHT = WIDTH = 16
FEATURE_DIM = 32    # image_feature_dim
ATTN_HIDDEN = 128   # attention hidden width (nn.Linear(D, 128))
NUM_CLASSES = 4
LANES = 128
OUT_SUBLANES = 8    # output padded to a full sublane tile


# --------------------------- fused Pallas kernel -----------------------------
def attention_mil_kernel(x_ref, pw_ref, out_ref):
    """Fused forward pass.

    x_ref  : (N, C*HW)     N = batch*num_tiles; row n = [c0 pixels | c1 | ...]
                           (free contiguous reshape of NCHW, (8,128)-dense)
    pw_ref : (8 + 2D, 128) packed params:
               rows 0..C-1, cols 0..D-1 : wf / HW   (GAP 1/HW folded in)
               row  C,      cols 0..D-1 : bf
               row  C+1                 : b1
               row  C+2                 : w2 (Linear(128,1) weight row)
               row  C+3, cols 0..NC-1   : bc (lane padded)
               rows 8..8+D-1            : w1 (D, 128)
               rows 8+D..8+2D-1         : wc (D, NC lane-padded to 128)
    out_ref: (8, 128)      dense padded logits; rows >= B / cols >= NC are pad.
    """
    N, CHW = x_ref.shape
    D = (pw_ref.shape[0] - 8) // 2
    C = CHANNELS
    HW = CHW // C
    B = BATCH
    T = N // B
    OUT_ROWS = out_ref.shape[0]

    # ---- surrogate feature extractor: GAP + Linear(C, D) fused on the VPU ----
    # Per-channel static 128-aligned lane slices of x; 1/HW folded into wf.
    feats = jnp.sum(x_ref[:, 0:HW], axis=-1, keepdims=True) * pw_ref[0:1, 0:D]
    for c in range(1, C):
        pooled_c = jnp.sum(x_ref[:, c * HW:(c + 1) * HW], axis=-1, keepdims=True)
        feats = feats + pooled_c * pw_ref[c:c + 1, 0:D]
    feats = feats + pw_ref[C:C + 1, 0:D]                      # (N, D)
    # TODO(synk): if N grows, replace this unrolled broadcast-FMA chain with a
    # single MXU dot_general (pooled (N,C) @ wf, K padded to 8).

    # ---- attention MLP --------------------------------------------------------
    # Layer 1 (D -> 128): the only matmul worth the MXU at these sizes.
    h = jnp.tanh(
        jnp.dot(feats, pw_ref[8:8 + D, :], preferred_element_type=jnp.float32)
        + pw_ref[C + 1:C + 2, :]
    )                                                         # (N, 128)

    # Layer 2 (128 -> 1) as multiply + lane reduction; its bias cancels under
    # the softmax over tiles.
    scores = jnp.sum(h * pw_ref[C + 2:C + 3, :], axis=-1, keepdims=True)  # (N, 1)

    # ---- per-bag softmax + attention-weighted pooling -------------------------
    # Unrolled over the tiny batch; everything stays 2-D (no in-kernel 3-D
    # reshapes that could materialize hidden VMEM copies).
    rows = []
    for b in range(B):
        s = scores[b * T:(b + 1) * T, :]                      # (T, 1)
        e = jnp.exp(s - jnp.max(s, axis=0, keepdims=True))
        attn = e * pl.reciprocal(jnp.sum(e, axis=0, keepdims=True), approx=True)
        fb = feats[b * T:(b + 1) * T, :]                      # (T, D)
        rows.append(jnp.sum(fb * attn, axis=0, keepdims=True))  # (1, D)
    rows.append(jnp.zeros((OUT_ROWS - B, D), jnp.float32))    # sublane pad rows
    attended = jnp.concatenate(rows, axis=0)                  # (8, D)

    # TODO(synk): nn.Dropout(0.2) treated as identity (inference/eval semantics).
    attended = jnp.maximum(attended, 0.0)                     # ReLU

    # ---- classifier: full (8, 128) unmasked sublane/lane-dense store ----------
    out_ref[...] = (
        jnp.dot(attended, pw_ref[8 + D:8 + 2 * D, :],
                preferred_element_type=jnp.float32)
        + pw_ref[C + 3:C + 4, :]
    )


# ------------------------------- wrapper -------------------------------------
def pack_params(params):
    """Fold GAP 1/HW into wf and pack ALL params into one (8 + 2*D, 128) slab.

    Called ONCE at init — hoisted off the per-forward path (the ~8 tiny XLA
    packing ops previously cost more than the kernel itself)."""
    C, D, AH, NC = CHANNELS, FEATURE_DIM, ATTN_HIDDEN, NUM_CLASSES
    HW = HEIGHT * WIDTH
    assert AH == LANES and C + 4 <= 8 and D <= LANES and NC <= LANES

    p = jnp.zeros((8, LANES), jnp.float32)
    p = p.at[0:C, 0:D].set(params["wf"] / float(HW))          # fold GAP 1/HW
    p = p.at[C, 0:D].set(params["bf"].reshape(D))
    p = p.at[C + 1, :].set(params["b1"].reshape(AH))
    p = p.at[C + 2, :].set(params["w2"].reshape(AH))
    p = p.at[C + 3, 0:NC].set(params["bc"].reshape(NC))
    # params["b2"] intentionally unused: a constant added to every tile's
    # attention score is removed by the softmax over tiles.

    wc_pad = jnp.zeros((D, LANES), jnp.float32).at[:, 0:NC].set(params["wc"])
    return jnp.concatenate([p, params["w1"], wc_pad], axis=0)  # (8 + 2D, 128)


@jax.jit
def attention_mil_forward(x, packed_params):
    """x: (batch, num_tiles, channels, height, width) — NCHW per tile.
    packed_params: output of pack_params() (build once, reuse every call)."""
    B, T, C, H, W = x.shape
    N = B * T

    # Free contiguous reshape of NCHW -> (N, C*H*W) = (16, 1024): exactly
    # (8,128)-dense -> one dense input DMA, full sublane occupancy.
    x_flat = x.reshape(N, C * H * W)

    vmem = pl.BlockSpec(memory_space=pltpu.MemorySpace.VMEM)
    out_padded = pl.pallas_call(
        attention_mil_kernel,
        out_shape=jax.ShapeDtypeStruct((OUT_SUBLANES, LANES), jnp.float32),
        in_specs=[vmem, vmem],     # gridless: whole arrays in VMEM, no pipeline
        out_specs=vmem,
    )(x_flat, packed_params)

    # TODO(synk): if N (= batch*tiles) or H*W grows, add a grid axis over N
    # marked "parallel" (2nd TensorCore on v7x), re-derive the x tile against
    # v7x's 64 MiB VMEM / v5e's 16 MiB scoped default (vmem_limit_bytes), move
    # the feature Linear onto the MXU, and cast the two matmuls to bf16 on
    # v6e/v7x.  At the current ~100 KB working set, gridless is optimal.
    # TODO(synk): downstream consumers can read the padded (8, 128) logits
    # directly and skip this slice; it is kept for the (B, NUM_CLASSES) API
    # and is fused into this jit anyway.
    return out_padded[:B, :NUM_CLASSES]


def init_params(key):
    ks = jax.random.split(key, 7)
    scale = 0.1
    # Weights stored as (in, out) — equivalent to torch Linear weight transposed.
    return {
        "wf": scale * jax.random.normal(ks[0], (CHANNELS, FEATURE_DIM), jnp.float32),
        "bf": scale * jax.random.normal(ks[1], (1, FEATURE_DIM), jnp.float32),
        "w1": scale * jax.random.normal(ks[2], (FEATURE_DIM, ATTN_HIDDEN), jnp.float32),
        "b1": scale * jax.random.normal(ks[3], (1, ATTN_HIDDEN), jnp.float32),
        "w2": scale * jax.random.normal(ks[4], (ATTN_HIDDEN, 1), jnp.float32),
        "b2": jnp.zeros((1, 1), jnp.float32),   # cancels under softmax; kept for parity
        "wc": scale * jax.random.normal(ks[5], (FEATURE_DIM, NUM_CLASSES), jnp.float32),
        "bc": scale * jax.random.normal(ks[6], (1, NUM_CLASSES), jnp.float32),
    }


if __name__ == "__main__":
    key = jax.random.PRNGKey(0)
    k_x, k_p = jax.random.split(key)

    x = jax.random.normal(
        k_x, (BATCH, NUM_TILES, CHANNELS, HEIGHT, WIDTH), jnp.float32
    )
    params = init_params(k_p)

    # One-time parameter packing, off the per-forward path.
    packed = jax.block_until_ready(pack_params(params))

    logits = attention_mil_forward(x, packed)
    logits = jax.block_until_ready(logits)

    assert logits.shape == (BATCH, NUM_CLASSES), logits.shape
    assert jnp.all(jnp.isfinite(logits))
    print("KERNEL_OK")
</pallas_src>

<mosaic_0001>
module attributes {stable_mosaic.version = 11 : i64} {
  func.func @attention_mil_kernel(%arg0: memref<16x1024xf32, #tpu.memory_space<vmem>>, %arg1: memref<72x128xf32, #tpu.memory_space<vmem>>, %arg2: memref<8x128xf32, #tpu.memory_space<vmem>>) attributes {dimension_semantics = [], scalar_prefetch = 0 : i64, scratch_operands = 0 : i64, tpu.core_type = #tpu.core_type<tc>} {
    %c0 = arith.constant 0 : index
    %c0_0 = arith.constant 0 : index
    %0 = vector.load %arg0[%c0, %c0_0] : memref<16x1024xf32, #tpu.memory_space<vmem>>, vector<16x256xf32>
    %cst = arith.constant dense<0.000000e+00> : vector<16xf32>
    %1 = vector.multi_reduction <add>, %0, %cst [1] : vector<16x256xf32> to vector<16xf32>
    %2 = vector.shape_cast %1 : vector<16xf32> to vector<16x1xf32>
    %c0_1 = arith.constant 0 : index
    %c0_2 = arith.constant 0 : index
    %3 = vector.load %arg1[%c0_1, %c0_2] : memref<72x128xf32, #tpu.memory_space<vmem>>, vector<1x32xf32>
    %4 = vector.broadcast %2 : vector<16x1xf32> to vector<16x32xf32>
    %5 = vector.broadcast %3 : vector<1x32xf32> to vector<16x32xf32>
    %6 = arith.mulf %4, %5 : vector<16x32xf32>
    %c0_3 = arith.constant 0 : index
    %c256 = arith.constant 256 : index
    %7 = vector.load %arg0[%c0_3, %c256] : memref<16x1024xf32, #tpu.memory_space<vmem>>, vector<16x256xf32>
    %cst_4 = arith.constant dense<0.000000e+00> : vector<16xf32>
    %8 = vector.multi_reduction <add>, %7, %cst_4 [1] : vector<16x256xf32> to vector<16xf32>
    %9 = vector.shape_cast %8 : vector<16xf32> to vector<16x1xf32>
    %c1 = arith.constant 1 : index
    %c0_5 = arith.constant 0 : index
    %10 = vector.load %arg1[%c1, %c0_5] : memref<72x128xf32, #tpu.memory_space<vmem>>, vector<1x32xf32>
    %11 = vector.broadcast %9 : vector<16x1xf32> to vector<16x32xf32>
    %12 = vector.broadcast %10 : vector<1x32xf32> to vector<16x32xf32>
    %13 = arith.mulf %11, %12 : vector<16x32xf32>
    %14 = arith.addf %6, %13 : vector<16x32xf32>
    %c0_6 = arith.constant 0 : index
    %c512 = arith.constant 512 : index
    %15 = vector.load %arg0[%c0_6, %c512] : memref<16x1024xf32, #tpu.memory_space<vmem>>, vector<16x256xf32>
    %cst_7 = arith.constant dense<0.000000e+00> : vector<16xf32>
    %16 = vector.multi_reduction <add>, %15, %cst_7 [1] : vector<16x256xf32> to vector<16xf32>
    %17 = vector.shape_cast %16 : vector<16xf32> to vector<16x1xf32>
    %c2 = arith.constant 2 : index
    %c0_8 = arith.constant 0 : index
    %18 = vector.load %arg1[%c2, %c0_8] : memref<72x128xf32, #tpu.memory_space<vmem>>, vector<1x32xf32>
    %19 = vector.broadcast %17 : vector<16x1xf32> to vector<16x32xf32>
    %20 = vector.broadcast %18 : vector<1x32xf32> to vector<16x32xf32>
    %21 = arith.mulf %19, %20 : vector<16x32xf32>
    %22 = arith.addf %14, %21 : vector<16x32xf32>
    %c0_9 = arith.constant 0 : index
    %c768 = arith.constant 768 : index
    %23 = vector.load %arg0[%c0_9, %c768] : memref<16x1024xf32, #tpu.memory_space<vmem>>, vector<16x256xf32>
    %cst_10 = arith.constant dense<0.000000e+00> : vector<16xf32>
    %24 = vector.multi_reduction <add>, %23, %cst_10 [1] : vector<16x256xf32> to vector<16xf32>
    %25 = vector.shape_cast %24 : vector<16xf32> to vector<16x1xf32>
    %c3 = arith.constant 3 : index
    %c0_11 = arith.constant 0 : index
    %26 = vector.load %arg1[%c3, %c0_11] : memref<72x128xf32, #tpu.memory_space<vmem>>, vector<1x32xf32>
    %27 = vector.broadcast %25 : vector<16x1xf32> to vector<16x32xf32>
    %28 = vector.broadcast %26 : vector<1x32xf32> to vector<16x32xf32>
    %29 = arith.mulf %27, %28 : vector<16x32xf32>
    %30 = arith.addf %22, %29 : vector<16x32xf32>
    %c4 = arith.constant 4 : index
    %c0_12 = arith.constant 0 : index
    %31 = vector.load %arg1[%c4, %c0_12] : memref<72x128xf32, #tpu.memory_space<vmem>>, vector<1x32xf32>
    %32 = vector.broadcast %31 : vector<1x32xf32> to vector<16x32xf32>
    %33 = arith.addf %30, %32 : vector<16x32xf32>
    %c8 = arith.constant 8 : index
    %c0_13 = arith.constant 0 : index
    %34 = vector.load %arg1[%c8, %c0_13] : memref<72x128xf32, #tpu.memory_space<vmem>>, vector<32x128xf32>
    %cst_14 = arith.constant dense<0.000000e+00> : vector<16x128xf32>
    %35 = tpu.matmul %33, %34, %cst_14 {dimension_numbers = #tpu.dot_dimension_numbers<[1], [0], [0], [1], [0, 0, 1, 1], [], []>} : vector<16x32xf32>, vector<32x128xf32>, vector<16x128xf32> -> vector<16x128xf32>
    %c5 = arith.constant 5 : index
    %c0_15 = arith.constant 0 : index
    %36 = vector.load %arg1[%c5, %c0_15] : memref<72x128xf32, #tpu.memory_space<vmem>>, vector<1x128xf32>
    %37 = vector.broadcast %36 : vector<1x128xf32> to vector<16x128xf32>
    %38 = arith.addf %35, %37 : vector<16x128xf32>
    %39 = math.tanh %38 : vector<16x128xf32>
    %c6 = arith.constant 6 : index
    %c0_16 = arith.constant 0 : index
    %40 = vector.load %arg1[%c6, %c0_16] : memref<72x128xf32, #tpu.memory_space<vmem>>, vector<1x128xf32>
    %41 = vector.broadcast %40 : vector<1x128xf32> to vector<16x128xf32>
    %42 = arith.mulf %39, %41 : vector<16x128xf32>
    %cst_17 = arith.constant dense<0.000000e+00> : vector<16xf32>
    %43 = vector.multi_reduction <add>, %42, %cst_17 [1] : vector<16x128xf32> to vector<16xf32>
    %44 = vector.shape_cast %43 : vector<16xf32> to vector<16x1xf32>
    %45 = vector.extract_strided_slice %44 {offsets = [0, 0], sizes = [8, 1], strides = [1, 1]} : vector<16x1xf32> to vector<8x1xf32>
    %cst_18 = arith.constant dense<0xFF800000> : vector<1xf32>
    %46 = vector.multi_reduction <maximumf>, %45, %cst_18 [0] : vector<8x1xf32> to vector<1xf32>
    %47 = vector.shape_cast %46 : vector<1xf32> to vector<1x1xf32>
    %48 = vector.broadcast %47 : vector<1x1xf32> to vector<8x1xf32>
    %49 = arith.subf %45, %48 : vector<8x1xf32>
    %50 = math.exp %49 : vector<8x1xf32>
    %cst_19 = arith.constant dense<0.000000e+00> : vector<1xf32>
    %51 = vector.multi_reduction <add>, %50, %cst_19 [0] : vector<8x1xf32> to vector<1xf32>
    %52 = vector.shape_cast %51 : vector<1xf32> to vector<1x1xf32>
    %53 = tpu.reciprocal %52 {approx = true} : vector<1x1xf32> -> vector<1x1xf32>
    %54 = vector.broadcast %53 : vector<1x1xf32> to vector<8x1xf32>
    %55 = arith.mulf %50, %54 : vector<8x1xf32>
    %56 = vector.extract_strided_slice %33 {offsets = [0, 0], sizes = [8, 32], strides = [1, 1]} : vector<16x32xf32> to vector<8x32xf32>
    %57 = vector.broadcast %55 : vector<8x1xf32> to vector<8x32xf32>
    %58 = arith.mulf %56, %57 : vector<8x32xf32>
    %cst_20 = arith.constant dense<0.000000e+00> : vector<32xf32>
    %59 = vector.multi_reduction <add>, %58, %cst_20 [0] : vector<8x32xf32> to vector<32xf32>
    %60 = vector.shape_cast %59 : vector<32xf32> to vector<1x32xf32>
    %61 = vector.extract_strided_slice %44 {offsets = [8, 0], sizes = [8, 1], strides = [1, 1]} : vector<16x1xf32> to vector<8x1xf32>
    %cst_21 = arith.constant dense<0xFF800000> : vector<1xf32>
    %62 = vector.multi_reduction <maximumf>, %61, %cst_21 [0] : vector<8x1xf32> to vector<1xf32>
    %63 = vector.shape_cast %62 : vector<1xf32> to vector<1x1xf32>
    %64 = vector.broadcast %63 : vector<1x1xf32> to vector<8x1xf32>
    %65 = arith.subf %61, %64 : vector<8x1xf32>
    %66 = math.exp %65 : vector<8x1xf32>
    %cst_22 = arith.constant dense<0.000000e+00> : vector<1xf32>
    %67 = vector.multi_reduction <add>, %66, %cst_22 [0] : vector<8x1xf32> to vector<1xf32>
    %68 = vector.shape_cast %67 : vector<1xf32> to vector<1x1xf32>
    %69 = tpu.reciprocal %68 {approx = true} : vector<1x1xf32> -> vector<1x1xf32>
    %70 = vector.broadcast %69 : vector<1x1xf32> to vector<8x1xf32>
    %71 = arith.mulf %66, %70 : vector<8x1xf32>
    %72 = vector.extract_strided_slice %33 {offsets = [8, 0], sizes = [8, 32], strides = [1, 1]} : vector<16x32xf32> to vector<8x32xf32>
    %73 = vector.broadcast %71 : vector<8x1xf32> to vector<8x32xf32>
    %74 = arith.mulf %72, %73 : vector<8x32xf32>
    %cst_23 = arith.constant dense<0.000000e+00> : vector<32xf32>
    %75 = vector.multi_reduction <add>, %74, %cst_23 [0] : vector<8x32xf32> to vector<32xf32>
    %76 = vector.shape_cast %75 : vector<32xf32> to vector<1x32xf32>
    %cst_24 = arith.constant 0.000000e+00 : f32
    %77 = vector.broadcast %cst_24 : f32 to vector<6x32xf32>
    %78 = tpu.concatenate %60, %76, %77 in 0 : vector<1x32xf32>, vector<1x32xf32>, vector<6x32xf32> -> vector<8x32xf32>
    %cst_25 = arith.constant 0.000000e+00 : f32
    %79 = vector.broadcast %cst_25 : f32 to vector<8x32xf32>
    %80 = arith.maximumf %78, %79 : vector<8x32xf32>
    %c40 = arith.constant 40 : index
    %c0_26 = arith.constant 0 : index
    %81 = vector.load %arg1[%c40, %c0_26] : memref<72x128xf32, #tpu.memory_space<vmem>>, vector<32x128xf32>
    %cst_27 = arith.constant dense<0.000000e+00> : vector<8x128xf32>
    %82 = tpu.matmul %80, %81, %cst_27 {dimension_numbers = #tpu.dot_dimension_numbers<[1], [0], [0], [1], [0, 0, 1, 1], [], []>} : vector<8x32xf32>, vector<32x128xf32>, vector<8x128xf32> -> vector<8x128xf32>
    %c7 = arith.constant 7 : index
    %c0_28 = arith.constant 0 : index
    %83 = vector.load %arg1[%c7, %c0_28] : memref<72x128xf32, #tpu.memory_space<vmem>>, vector<1x128xf32>
    %84 = vector.broadcast %83 : vector<1x128xf32> to vector<8x128xf32>
    %85 = arith.addf %82, %84 : vector<8x128xf32>
    %c0_29 = arith.constant 0 : index
    %c0_30 = arith.constant 0 : index
    %86 = vector.load %arg2[%c0_29, %c0_30] : memref<8x128xf32, #tpu.memory_space<vmem>>, vector<8x128xf32>
    tpu.vector_store %arg2[%c0_29, %c0_30], %85 {strides = array<i32>} : memref<8x128xf32, #tpu.memory_space<vmem>>, vector<8x128xf32>,
    return
  }
}

</mosaic_0001>

<llo_original>
// kernel: attention_mil_forward.1
$region0: #{attention_mil_forward.1}
  #allocation0 [shape = 'u32[]', space=smem, size = 0x4, offset = 0x4, fixed_abs, tag = 'smem constant byte address 0x4 - core index']
  #allocation1 [shape = 'u32[144,128]{1,0:T(1,128)}', space=vmem, size = 0x12000, scoped, tag = 'internal scratch']
  %s0 = inlined_call_operand.vmem [shape: f32[16,1024], index: 0, kind: input, shape index: {}]
  %s1 = inlined_call_operand.vmem [shape: f32[72,128], index: 1, kind: input, shape index: {}]
  %s2 = inlined_call_operand.vmem [shape: f32[8,128], index: 2, kind: output, shape index: {}]
  %s3 = sld [smem:[#allocation0]]
  $region18: #{attention_mil_forward.1} parent=0
    _
  %s5 = ssub.s32 1, %s3
  %s6 = scalar_select 0, %s5, %s3
  // Predicated region
  $region2: #{attention_mil_forward.1} parent=0 // pred_check
    _
  $region3: #{attention_mil_forward.1} parent=0 // pred_check_branch
    %8 = sbr.rel (0) target = $region5
  $region4: #{attention_mil_forward.1} parent=0 // pred_region
    _
  $region5: #{attention_mil_forward.1} parent=0 // pred_fallthru
    _
  // Predicated region
  $region6: #{attention_mil_forward.1} parent=0 // pred_check
    _
  $region7: #{attention_mil_forward.1} parent=0 // pred_check_branch
    %10 = sbr.rel (0) target = $region9
  $region8: #{attention_mil_forward.1} parent=0 // pred_region
    _
  $region9: #{attention_mil_forward.1} parent=0 // pred_fallthru
    _
  %v11 = vld [vmem:[%s0] sm:$0xff]
  %v12 = vld [vmem:[%s0 + $0x8] sm:$0xff]
  %v13 = vld [vmem:[%s0 + $0x40] sm:$0xff]
  %v14 = vld [vmem:[%s0 + $0x48] sm:$0xff]
  %v15 = vadd.f32 %v11, %v12
  %16 = vadd.xlane.f32.xlu0 %v15
  %v17 = vpop.xlane.xlu0 %16
  %v18 = vadd.f32 %v13, %v14
  %19 = vadd.xlane.f32.xlu0 %v18
  %v20 = vpop.xlane.xlu0 %19
  %v21 = vld [vmem:[%s1] sm:$0x1]
  %v22 = vlaneseq
  %v23 = vshrl.u32 %v22, 7
  %v24 = vsub.s32 0, %v23
  %v25 = vrot.slane %v21, %v24
  %v26 = vmul.f32 %v17, %v25
  %v27 = vmul.f32 %v20, %v25
  %v28 = vld [vmem:[%s0 + $0x10] sm:$0xff]
  %v29 = vld [vmem:[%s0 + $0x18] sm:$0xff]
  %v30 = vld [vmem:[%s0 + $0x50] sm:$0xff]
  %v31 = vld [vmem:[%s0 + $0x58] sm:$0xff]
  %v32 = vadd.f32 %v28, %v29
  %33 = vadd.xlane.f32.xlu0 %v32
  %v34 = vpop.xlane.xlu0 %33
  %v35 = vadd.f32 %v30, %v31
  %36 = vadd.xlane.f32.xlu0 %v35
  %v37 = vpop.xlane.xlu0 %36
  %v38 = vld [vmem:[%s1 + $0x1] sm:$0x1]
  %v39 = vlaneseq
  %v40 = vshrl.u32 %v39, 7
  %v41 = vsub.s32 0, %v40
  %v42 = vrot.slane %v38, %v41
  %v43 = vmul.f32 %v34, %v42
  %v44 = vmul.f32 %v37, %v42
  %v45 = vadd.f32 %v26, %v43
  %v46 = vadd.f32 %v27, %v44
  %v47 = vld [vmem:[%s0 + $0x20] sm:$0xff]
  %v48 = vld [vmem:[%s0 + $0x28] sm:$0xff]
  %v49 = vld [vmem:[%s0 + $0x60] sm:$0xff]
  %v50 = vld [vmem:[%s0 + $0x68] sm:$0xff]
  %v51 = vadd.f32 %v47, %v48
  %52 = vadd.xlane.f32.xlu0 %v51
  %v53 = vpop.xlane.xlu0 %52
  %v54 = vadd.f32 %v49, %v50
  %55 = vadd.xlane.f32.xlu0 %v54
  %v56 = vpop.xlane.xlu0 %55
  %v57 = vld [vmem:[%s1 + $0x2] sm:$0x1]
  %v58 = vlaneseq
  %v59 = vshrl.u32 %v58, 7
  %v60 = vsub.s32 0, %v59
  %v61 = vrot.slane %v57, %v60
  %v62 = vmul.f32 %v53, %v61
  %v63 = vmul.f32 %v56, %v61
  %v64 = vadd.f32 %v45, %v62
  %v65 = vadd.f32 %v46, %v63
  %v66 = vld [vmem:[%s0 + $0x30] sm:$0xff]
  %v67 = vld [vmem:[%s0 + $0x38] sm:$0xff]
  %v68 = vld [vmem:[%s0 + $0x70] sm:$0xff]
  %v69 = vld [vmem:[%s0 + $0x78] sm:$0xff]
  %v70 = vadd.f32 %v66, %v67
  %71 = vadd.xlane.f32.xlu0 %v70
  %v72 = vpop.xlane.xlu0 %71
  %v73 = vadd.f32 %v68, %v69
  %74 = vadd.xlane.f32.xlu0 %v73
  %v75 = vpop.xlane.xlu0 %74
  %v76 = vld [vmem:[%s1 + $0x3] sm:$0x1]
  %v77 = vlaneseq
  %v78 = vshrl.u32 %v77, 7
  %v79 = vsub.s32 0, %v78
  %v80 = vrot.slane %v76, %v79
  %v81 = vmul.f32 %v72, %v80
  %v82 = vmul.f32 %v75, %v80
  %v83 = vadd.f32 %v64, %v81
  %v84 = vadd.f32 %v65, %v82
  %v85 = vld [vmem:[%s1 + $0x4] sm:$0x1]
  %v86 = vlaneseq
  %v87 = vshrl.u32 %v86, 7
  %v88 = vsub.s32 0, %v87
  %v89 = vrot.slane %v85, %v88
  %v90 = vadd.f32 %v83, %v89
  %v91 = vadd.f32 %v84, %v89
  %v92 = vld [vmem:[%s1 + $0x8] sm:$0xff]
  %v93 = vld [vmem:[%s1 + $0x10] sm:$0xff]
  %v94 = vld [vmem:[%s1 + $0x18] sm:$0xff]
  %v95 = vld [vmem:[%s1 + $0x20] sm:$0xff]
  %v96 = vld [vmem:[%s1 + $0x5] sm:$0x1]
  %v97 = vlaneseq
  %v98 = vshrl.u32 %v97, 7
  %v99 = vsub.s32 0, %v98
  %v100 = vrot.slane %v96, %v99
  %vm101 = vcmask 261120
  %v103 = vsel %vm101, %v90, 0
  %v106 = vsel %vm101, %v91, 0
  %108 = vmatprep.subr.mxu0 0.0
  %109 = vmatpush1.msra.mxu0 %v92
  %110 = vmatprep.subr.mxu0 0.0
  %111 = vmatpush1.msra.mxu0 %v93
  %112 = vmatprep.subr.mxu0 0.0
  %113 = vmatpush1.msra.mxu0 %v94
  %114 = vmatprep.subr.mxu0 0.0
  %115 = vmatpush1.msra.mxu0 %v95
  %116 = vmatprep.subr.mxu0 0.0
  %117 = vmatpush1.msra.mxu0 0.0
  %118 = vmatprep.subr.mxu0 0.0
  %119 = vmatpush1.msra.mxu0 0.0
  %120 = vmatprep.subr.mxu0 0.0
  %121 = vmatpush1.msra.mxu0 0.0
  %122 = vmatprep.subr.mxu0 0.0
  %123 = vmatpush1.msra.mxu0 0.0
  %124 = vmatprep.subr.mxu0 0.0
  %125 = vmatpush1.msra.mxu0 0.0
  %126 = vmatprep.subr.mxu0 0.0
  %127 = vmatpush1.msra.mxu0 0.0
  %128 = vmatprep.subr.mxu0 0.0
  %129 = vmatpush1.msra.mxu0 0.0
  %130 = vmatprep.subr.mxu0 0.0
  %131 = vmatpush1.msra.mxu0 0.0
  %132 = vmatprep.subr.mxu0 0.0
  %133 = vmatpush1.msra.mxu0 0.0
  %134 = vmatprep.subr.mxu0 0.0
  %135 = vmatpush1.msra.mxu0 0.0
  %136 = vmatprep.subr.mxu0 0.0
  %137 = vmatpush1.msra.mxu0 0.0
  %138 = vmatprep.subr.mxu0 0.0
  %139 = vmatpush1.msra.mxu0 0.0
  %140 = vmatprep.subr.mxu0 0.0
  %141 = vmatpush1.msra.mxu0 0.0
  %142 = vmatprep.subr.mxu0 0.0
  %143 = vmatpush1.msra.mxu0 0.0
  %144 = vmatprep.subr.mxu0 0.0
  %145 = vmatpush1.msra.mxu0 0.0
  %146 = vmatprep.subr.mxu0 0.0
  %147 = vmatpush1.msra.mxu0 0.0
  %148 = vmatprep.subr.mxu0 0.0
  %149 = vmatpush1.msra.mxu0 0.0
  %150 = vmatprep.subr.mxu0 0.0
  %151 = vmatpush1.msra.mxu0 0.0
  %152 = vmatprep.subr.mxu0 0.0
  %153 = vmatpush1.msra.mxu0 0.0
  %154 = vmatprep.subr.mxu0 0.0
  %155 = vmatpush1.msra.mxu0 0.0
  %156 = vmatprep.subr.mxu0 0.0
  %157 = vmatpush1.msra.mxu0 0.0
  %158 = vmatprep.subr.mxu0 0.0
  %159 = vmatpush1.msra.mxu0 0.0
  %160 = vmatprep.subr.mxu0 0.0
  %161 = vmatpush1.msra.mxu0 0.0
  %162 = vmatprep.subr.mxu0 0.0
  %163 = vmatpush1.msra.mxu0 0.0
  %164 = vmatprep.subr.mxu0 0.0
  %165 = vmatpush1.msra.mxu0 0.0
  %166 = vmatprep.subr.mxu0 0.0
  %167 = vmatpush1.msra.mxu0 0.0
  %168 = vmatprep.subr.mxu0 0.0
  %169 = vmatpush1.msra.mxu0 0.0
  %170 = vmatprep.subr.mxu0 0.0
  %171 = vmatpush1.msra.mxu0 0.0
  %172 = vmatprep.mubr.f32.mxu0 0.0
  %173 = vmatmul.mubr.f32.gmra.mrb[0].mxu0 %v103
  %v174 = vpop.f32.mrb[0].mxu0
  %v175 = vadd.f32 %v100, %v174
  %v176 = vpop.f32.mrb[0].mxu0
  %177 = vmatprep.mubr.f32.mxu0 0.0
  %178 = vmatmul.mubr.f32.gmra.mrb[0].mxu0 %v106
  %v179 = vpop.f32.mrb[0].mxu0
  %v180 = vadd.f32 %v100, %v179
  %v181 = vpop.f32.mrb[0].mxu0
  %182 = vdwg.mxu0
  %v183 = vtanh.pop %v175
  %v184 = vtanh.pop %v180
  %v185 = vld [vmem:[%s1 + $0x6] sm:$0x1]
  %v186 = vlaneseq
  %v187 = vshrl.u32 %v186, 7
  %v188 = vsub.s32 0, %v187
  %v189 = vrot.slane %v185, %v188
  %v190 = vmul.f32 %v183, %v189
  %v191 = vmul.f32 %v184, %v189
  %192 = vadd.xlane.f32.xlu0 %v190
  %v193 = vpop.xlane.xlu0 %192
  %194 = vadd.xlane.f32.xlu0 %v191
  %v195 = vpop.xlane.xlu0 %194
  %v196 = vrot.slane %v193, 4
  %v197 = vmax.f32 %v193, %v196
  %v198 = vrot.slane %v197, 2
  %v199 = vmax.f32 %v197, %v198
  %v200 = vrot.slane %v199, 1
  %v201 = vmax.f32 %v199, %v200
  %v202 = vsub.f32 %v193, %v201
  %v203 = vmul.f32 %v202, 1.442695
  %v204 = vpow.pop %v203
  %v205 = vrot.slane %v204, 4
  %v206 = vadd.f32 %v204, %v205
  %v207 = vrot.slane %v206, 2
  %v208 = vadd.f32 %v206, %v207
  %v209 = vrot.slane %v208, 1
  %v210 = vadd.f32 %v208, %v209
  %v211 = vrcp.pop %v210
  %v212 = vmul.f32 %v204, %v211
  %v213 = vmul.f32 %v90, %v212
  %v214 = vsel %vm101, %v213, 0.0
  %v215 = vrot.slane %v214, 4
  %v216 = vadd.f32 %v214, %v215
  %v217 = vrot.slane %v216, 2
  %v218 = vadd.f32 %v216, %v217
  %v219 = vrot.slane %v218, 1
  %v220 = vadd.f32 %v218, %v219
  %v221 = vrot.slane %v195, 4
  %v222 = vmax.f32 %v195, %v221
  %v223 = vrot.slane %v222, 2
  %v224 = vmax.f32 %v222, %v223
  %v225 = vrot.slane %v224, 1
  %v226 = vmax.f32 %v224, %v225
  %v227 = vsub.f32 %v195, %v226
  %v228 = vmul.f32 %v227, 1.442695
  %v229 = vpow.pop %v228
  %v230 = vrot.slane %v229, 4
  %v231 = vadd.f32 %v229, %v230
  %v232 = vrot.slane %v231, 2
  %v233 = vadd.f32 %v231, %v232
  %v234 = vrot.slane %v233, 1
  %v235 = vadd.f32 %v233, %v234
  %v236 = vrcp.pop %v235
  %v237 = vmul.f32 %v229, %v236
  %v238 = vmul.f32 %v91, %v237
  %v239 = vsel %vm101, %v238, 0.0
  %v240 = vrot.slane %v239, 4
  %v241 = vadd.f32 %v239, %v240
  %v242 = vrot.slane %v241, 2
  %v243 = vadd.f32 %v241, %v242
  %v244 = vrot.slane %v243, 1
  %v245 = vadd.f32 %v243, %v244
  %vm246 = vcmask 1040384
  %v247 = vsel %vm246, %v220, %v245
  %vm248 = vcmask 1041408
  %v249 = vsel %vm248, %v247, 0.0
  %v250 = vmax.f32 %v249, 0.0
  %v251 = vld [vmem:[%s1 + $0x28] sm:$0xff]
  %v252 = vld [vmem:[%s1 + $0x30] sm:$0xff]
  %v253 = vld [vmem:[%s1 + $0x38] sm:$0xff]
  %v254 = vld [vmem:[%s1 + $0x40] sm:$0xff]
  %v255 = vld [vmem:[%s1 + $0x7] sm:$0x1]
  %v256 = vlaneseq
  %v257 = vshrl.u32 %v256, 7
  %v258 = vsub.s32 0, %v257
  %v259 = vrot.slane %v255, %v258
  %v261 = vsel %vm101, %v250, 0
  %263 = vmatprep.subr.mxu0 0.0
  %264 = vmatpush1.msra.mxu0 %v251
  %265 = vmatprep.subr.mxu0 0.0
  %266 = vmatpush1.msra.mxu0 %v252
  %267 = vmatprep.subr.mxu0 0.0
  %268 = vmatpush1.msra.mxu0 %v253
  %269 = vmatprep.subr.mxu0 0.0
  %270 = vmatpush1.msra.mxu0 %v254
  %271 = vmatprep.subr.mxu0 0.0
  %272 = vmatpush1.msra.mxu0 0.0
  %273 = vmatprep.subr.mxu0 0.0
  %274 = vmatpush1.msra.mxu0 0.0
  %275 = vmatprep.subr.mxu0 0.0
  %276 = vmatpush1.msra.mxu0 0.0
  %277 = vmatprep.subr.mxu0 0.0
  %278 = vmatpush1.msra.mxu0 0.0
  %279 = vmatprep.subr.mxu0 0.0
  %280 = vmatpush1.msra.mxu0 0.0
  %281 = vmatprep.subr.mxu0 0.0
  %282 = vmatpush1.msra.mxu0 0.0
  %283 = vmatprep.subr.mxu0 0.0
  %284 = vmatpush1.msra.mxu0 0.0
  %285 = vmatprep.subr.mxu0 0.0
  %286 = vmatpush1.msra.mxu0 0.0
  %287 = vmatprep.subr.mxu0 0.0
  %288 = vmatpush1.msra.mxu0 0.0
  %289 = vmatprep.subr.mxu0 0.0
  %290 = vmatpush1.msra.mxu0 0.0
  %291 = vmatprep.subr.mxu0 0.0
  %292 = vmatpush1.msra.mxu0 0.0
  %293 = vmatprep.subr.mxu0 0.0
  %294 = vmatpush1.msra.mxu0 0.0
  %295 = vmatprep.subr.mxu0 0.0
  %296 = vmatpush1.msra.mxu0 0.0
  %297 = vmatprep.subr.mxu0 0.0
  %298 = vmatpush1.msra.mxu0 0.0
  %299 = vmatprep.subr.mxu0 0.0
  %300 = vmatpush1.msra.mxu0 0.0
  %301 = vmatprep.subr.mxu0 0.0
  %302 = vmatpush1.msra.mxu0 0.0
  %303 = vmatprep.subr.mxu0 0.0
  %304 = vmatpush1.msra.mxu0 0.0
  %305 = vmatprep.subr.mxu0 0.0
  %306 = vmatpush1.msra.mxu0 0.0
  %307 = vmatprep.subr.mxu0 0.0
  %308 = vmatpush1.msra.mxu0 0.0
  %309 = vmatprep.subr.mxu0 0.0
  %310 = vmatpush1.msra.mxu0 0.0
  %311 = vmatprep.subr.mxu0 0.0
  %312 = vmatpush1.msra.mxu0 0.0
  %313 = vmatprep.subr.mxu0 0.0
  %314 = vmatpush1.msra.mxu0 0.0
  %315 = vmatprep.subr.mxu0 0.0
  %316 = vmatpush1.msra.mxu0 0.0
  %317 = vmatprep.subr.mxu0 0.0
  %318 = vmatpush1.msra.mxu0 0.0
  %319 = vmatprep.subr.mxu0 0.0
  %320 = vmatpush1.msra.mxu0 0.0
  %321 = vmatprep.subr.mxu0 0.0
  %322 = vmatpush1.msra.mxu0 0.0
  %323 = vmatprep.subr.mxu0 0.0
  %324 = vmatpush1.msra.mxu0 0.0
  %325 = vmatprep.subr.mxu0 0.0
  %326 = vmatpush1.msra.mxu0 0.0
  %327 = vmatprep.mubr.f32.mxu0 0.0
  %328 = vmatmul.mubr.f32.gmra.mrb[0].mxu0 %v261
  %v329 = vpop.f32.mrb[0].mxu0
  %v330 = vadd.f32 %v259, %v329
  %v331 = vpop.f32.mrb[0].mxu0
  %332 = vdwg.mxu0
  %333 = vst [vmem:[%s2] sm:$0xff] %v330
  // Predicated region
  $region10: #{attention_mil_forward.1} parent=0 // pred_check
    _
  $region11: #{attention_mil_forward.1} parent=0 // pred_check_branch
    %335 = sbr.rel (0) target = $region13
  $region12: #{attention_mil_forward.1} parent=0 // pred_region
    _
  $region13: #{attention_mil_forward.1} parent=0 // pred_fallthru
    _
  // Predicated region
  $region14: #{attention_mil_forward.1} parent=0 // pred_check
    _
  $region15: #{attention_mil_forward.1} parent=0 // pred_check_branch
    %337 = sbr.rel (0) target = $region17
  $region16: #{attention_mil_forward.1} parent=0 // pred_region
    _
  $region17: #{attention_mil_forward.1} parent=0 // pred_fallthru
    _

</llo_original>
